<compile_context>
chip_gen: v5e
topology: v5e:2x2
jax: 0.10.0
libtpu: 0.0.40
codegen_flags: <defaults>
</compile_context>

<pallas_src>
import jax
import jax.numpy as jnp
from jax.experimental import pallas as pl
from jax.experimental.pallas import tpu as pltpu


def linear_kernel(x_ref, wt_ref, b_ref, o_ref):
    # x_ref: (TB, IN), wt_ref: (IN, OUT) pre-transposed, b_ref: (1, OUT), o_ref: (TB, OUT)
    y = jnp.dot(x_ref[...], wt_ref[...], preferred_element_type=jnp.float32)
    y = y + b_ref[...]  # f32 bias add after f32 MXU accumulation
    o_ref[...] = y.astype(o_ref.dtype)


def _cost_estimate(B, IN, OUT, itemsize=4):
    # Advisory only: lets XLA overlap this tiny custom call with neighbouring HLO.
    return pl.CostEstimate(
        flops=2 * B * IN * OUT,
        transcendentals=0,
        bytes_accessed=(B * IN + IN * OUT + OUT + B * OUT) * itemsize,
    )


# 32 MiB scoped VMEM: <= physical VMEM on v5e/v6e (128 MiB) and v7x (64 MiB), and
# comfortably above the largest lane-padded working set either path allocates
# (gridless B=16384 -> ~16.5 MiB; grid tb=4096 double-buffered -> ~9 MiB).
_VMEM_LIMIT_BYTES = 32 * 1024 * 1024


def simple_model_forward(x, w, b, *, batch_tile=8192, grid_tile=4096):
    """y = x @ w.T + b.  x: (B, IN) f32, w: (OUT, IN) f32, b: (OUT,) f32 -> (B, OUT) f32."""
    B, IN = x.shape
    OUT = w.shape[0]
    w_t = w.T                # transpose once at trace time, never inside the kernel
    b2d = b.reshape(1, OUT)  # 2-D for TPU-friendly layout / broadcast

    # Gridless whenever a grid would not give each TensorCore >= 2 steps (v7x has
    # 2 TCs); per-step pipeline overhead dominates this HBM-bound kernel otherwise.
    gridless_max_b = max(batch_tile, 4 * grid_tile)

    if B <= gridless_max_b:
        # Single invocation: whole operands VMEM-resident, zero grid bookkeeping.
        return pl.pallas_call(
            linear_kernel,
            out_shape=jax.ShapeDtypeStruct((B, OUT), x.dtype),
            in_specs=[
                pl.BlockSpec(memory_space=pltpu.MemorySpace.VMEM),
                pl.BlockSpec(memory_space=pltpu.MemorySpace.VMEM),
                pl.BlockSpec(memory_space=pltpu.MemorySpace.VMEM),
            ],
            out_specs=pl.BlockSpec(memory_space=pltpu.MemorySpace.VMEM),
            cost_estimate=_cost_estimate(B, IN, OUT),
            compiler_params=pltpu.CompilerParams(
                vmem_limit_bytes=_VMEM_LIMIT_BYTES,
            ),
        )(x, w_t, b2d)

    # Genuinely large batch: tile the batch axis ('parallel' -> v7x megacore split);
    # weight/bias use constant block indices so their DMA is elided across steps.
    tb = grid_tile
    return pl.pallas_call(
        linear_kernel,
        out_shape=jax.ShapeDtypeStruct((B, OUT), x.dtype),
        grid=(pl.cdiv(B, tb),),
        in_specs=[
            pl.BlockSpec((tb, IN), lambda i: (i, 0)),
            pl.BlockSpec((IN, OUT), lambda i: (0, 0)),
            pl.BlockSpec((1, OUT), lambda i: (0, 0)),
        ],
        out_specs=pl.BlockSpec((tb, OUT), lambda i: (i, 0)),
        cost_estimate=_cost_estimate(B, IN, OUT),
        compiler_params=pltpu.CompilerParams(
            dimension_semantics=("parallel",),
            vmem_limit_bytes=_VMEM_LIMIT_BYTES,
        ),
    )(x, w_t, b2d)


if __name__ == "__main__":
    key = jax.random.PRNGKey(0)
    k_x, k_w, k_b, k_x2 = jax.random.split(key, 4)

    IN_FEATURES = 10
    OUT_FEATURES = 10
    BATCH = 8

    # Deterministic parameter init (mimics PyTorch Linear's U(-1/sqrt(in), 1/sqrt(in)))
    bound = 1.0 / (IN_FEATURES ** 0.5)
    w = jax.random.uniform(k_w, (OUT_FEATURES, IN_FEATURES),
                           minval=-bound, maxval=bound, dtype=jnp.float32)
    b = jax.random.uniform(k_b, (OUT_FEATURES,),
                           minval=-bound, maxval=bound, dtype=jnp.float32)

    # --- Small batch: gridless, fully VMEM-resident path ---
    x = jax.random.normal(k_x, (BATCH, IN_FEATURES), dtype=jnp.float32)
    y = jax.block_until_ready(simple_model_forward(x, w, b))
    y_ref = x @ w.T + b
    assert jnp.allclose(y, y_ref, atol=1e-5, rtol=1e-5), "small-batch mismatch vs reference"

    # --- Ragged batch forced onto the grid path (small tiles keep the test tiny):
    #     exercises the padded last block + 'parallel' batch grid ---
    B2 = 1025  # not a multiple of the tile -> last block is ragged
    x_big = jax.random.normal(k_x2, (B2, IN_FEATURES), dtype=jnp.float32)
    y_big = jax.block_until_ready(
        simple_model_forward(x_big, w, b, batch_tile=128, grid_tile=128))
    y_big_ref = x_big @ w.T + b
    assert jnp.allclose(y_big, y_big_ref, atol=1e-5, rtol=1e-5), "ragged/tiled mismatch vs reference"

    print("KERNEL_OK")
</pallas_src>

<mosaic_0001>
module attributes {stable_mosaic.version = 11 : i64} {
  func.func @linear_kernel(%arg0: memref<8x10xf32, #tpu.memory_space<vmem>>, %arg1: memref<10x10xf32, #tpu.memory_space<vmem>>, %arg2: memref<1x10xf32, #tpu.memory_space<vmem>>, %arg3: memref<8x10xf32, #tpu.memory_space<vmem>>) attributes {dimension_semantics = [], scalar_prefetch = 0 : i64, scratch_operands = 0 : i64, tpu.core_type = #tpu.core_type<tc>} {
    %c0 = arith.constant 0 : index
    %c0_0 = arith.constant 0 : index
    %0 = vector.load %arg0[%c0, %c0_0] : memref<8x10xf32, #tpu.memory_space<vmem>>, vector<8x10xf32>
    %c0_1 = arith.constant 0 : index
    %c0_2 = arith.constant 0 : index
    %1 = vector.load %arg1[%c0_1, %c0_2] : memref<10x10xf32, #tpu.memory_space<vmem>>, vector<10x10xf32>
    %cst = arith.constant dense<0.000000e+00> : vector<8x10xf32>
    %2 = tpu.matmul %0, %1, %cst {dimension_numbers = #tpu.dot_dimension_numbers<[1], [0], [0], [1], [0, 0, 1, 1], [], []>} : vector<8x10xf32>, vector<10x10xf32>, vector<8x10xf32> -> vector<8x10xf32>
    %c0_3 = arith.constant 0 : index
    %c0_4 = arith.constant 0 : index
    %3 = vector.load %arg2[%c0_3, %c0_4] : memref<1x10xf32, #tpu.memory_space<vmem>>, vector<1x10xf32>
    %4 = vector.broadcast %3 : vector<1x10xf32> to vector<8x10xf32>
    %5 = arith.addf %2, %4 : vector<8x10xf32>
    %c0_5 = arith.constant 0 : index
    %c0_6 = arith.constant 0 : index
    %6 = vector.load %arg3[%c0_5, %c0_6] : memref<8x10xf32, #tpu.memory_space<vmem>>, vector<8x10xf32>
    tpu.vector_store %arg3[%c0_5, %c0_6], %5 {strides = array<i32>} : memref<8x10xf32, #tpu.memory_space<vmem>>, vector<8x10xf32>,
    return
  }
}

</mosaic_0001>

<llo_original>
// kernel: tpu_custom_call.1
$region0: #{tpu_custom_call.1}
  #allocation0 [shape = 'u32[]', space=smem, size = 0x4, offset = 0x4, fixed_abs, tag = 'smem constant byte address 0x4 - core index']
  #allocation1 [shape = 'u32[72,128]{1,0:T(1,128)}', space=vmem, size = 0x9000, scoped, tag = 'internal scratch']
  %s0 = inlined_call_operand.hbm [shape: f32[8,10], index: 0, kind: input, shape index: {}]
  %s1 = inlined_call_operand.hbm [shape: f32[10,10], index: 1, kind: input, shape index: {}]
  %s2 = inlined_call_operand.vmem [shape: f32[1,10], index: 2, kind: input, shape index: {}]
  %s3 = inlined_call_operand.hbm [shape: f32[8,10], index: 3, kind: output, shape index: {}]
  %s4 = sld [smem:[#allocation0]]
  $region30: #{tpu_custom_call.1} parent=0
    _
  %s6 = ssub.s32 1, %s4
  %s7 = scalar_select 0, %s6, %s4
  $region1: #{tpu_custom_call.1} parent=0
    #allocation2 [shape = 'u8[4096]{0}', space=vmem, size = 0x1000, scoped, tag = 'input window, operand 0, single buffered']
    #allocation3 [shape = 's32[1]{0}', space=sflag, size = 0x4, scoped, tag = 'scoped memory for tpu_custom_call.1']
    #allocation4 [shape = 's32[1]{0}', space=sflag, size = 0x4, scoped, tag = 'scoped memory for tpu_custom_call.1']
    #allocation5 [shape = 'u8[8192]{0}', space=vmem, size = 0x2000, scoped, tag = 'input window, operand 1, single buffered']
    #allocation6 [shape = 's32[1]{0}', space=sflag, size = 0x4, scoped, tag = 'scoped memory for tpu_custom_call.1']
    #allocation7 [shape = 'u8[4096]{0}', space=vmem, size = 0x1000, scoped, tag = 'output window, operand 0, single buffered']
    %8 = vsyncpa [#allocation3], 0
    %9 = vsyncpa [#allocation6], 0
    %10 = vsyncpa [#allocation4], 0
    // Predicated region
    $region2: #{tpu_custom_call.1} parent=1 // pred_check
      _
    $region3: #{tpu_custom_call.1} parent=1 // pred_check_branch
      %12 = sbr.rel (0) target = $region5
    $region4: #{tpu_custom_call.1} parent=1 // pred_region
      %14 = vsyncadd [#allocation3], 0
      %s16 = sshll.u32 %s0, 4
      %s17 = int_to_ptr.hbm [resolvable:$true] %s16
      %s18 = sshll.u32 [#allocation2], 4
      %s19 = int_to_ptr.vmem [resolvable:$true] %s18
      %21 = dma.hbm_to_vmem [thread:$0]  %s17, 128, %s19, [#allocation3]
    $region5: #{tpu_custom_call.1} parent=1 // pred_fallthru
      _
    // Predicated region
    $region6: #{tpu_custom_call.1} parent=1 // pred_check
      _
    $region7: #{tpu_custom_call.1} parent=1 // pred_check_branch
      %23 = sbr.rel (0) target = $region9
    $region8: #{tpu_custom_call.1} parent=1 // pred_region
      %25 = vsyncadd [#allocation6], 0
      %s26 = sshll.u32 %s1, 4
      %s27 = int_to_ptr.hbm [resolvable:$true] %s26
      %s28 = sshll.u32 [#allocation5], 4
      %s29 = int_to_ptr.vmem [resolvable:$true] %s28
      %34 = dma.hbm_to_vmem [thread:$0]  %s27, 256, %s29, [#allocation6], 128, 128, 8
    $region9: #{tpu_custom_call.1} parent=1 // pred_fallthru
      _
    // Predicated region
    $region10: #{tpu_custom_call.1} parent=1 // pred_check
      _
    $region11: #{tpu_custom_call.1} parent=1 // pred_check_branch
      %36 = sbr.rel (0) target = $region13
    $region12: #{tpu_custom_call.1} parent=1 // pred_region
      _
    $region13: #{tpu_custom_call.1} parent=1 // pred_fallthru
      _
    // Predicated region
    $region14: #{tpu_custom_call.1} parent=1 // pred_check
      _
    $region15: #{tpu_custom_call.1} parent=1 // pred_check_branch
      %38 = sbr.rel (0) target = $region17
    $region16: #{tpu_custom_call.1} parent=1 // pred_region
      %40 = dma.done [#allocation3], 128
    $region17: #{tpu_custom_call.1} parent=1 // pred_fallthru
      _
    // Predicated region
    $region18: #{tpu_custom_call.1} parent=1 // pred_check
      _
    $region19: #{tpu_custom_call.1} parent=1 // pred_check_branch
      %42 = sbr.rel (0) target = $region21
    $region20: #{tpu_custom_call.1} parent=1 // pred_region
      %44 = dma.done [#allocation6], 256
    $region21: #{tpu_custom_call.1} parent=1 // pred_fallthru
      _
    %v45 = vld [vmem:[#allocation2] sm:$0xff]
    %v46 = vld [vmem:[#allocation5] sm:$0xff]
    %v47 = vld [vmem:[#allocation5 + $0x8] sm:$0x3]
    %v48 = vld [vmem:[%s2] sm:$0x1]
    %v50 = vperm.slane %v48, 0
    %vm52 = vcmask 80896
    %v54 = vsel %vm52, %v45, 0
    %vm56 = vcmask 1041408
    %v58 = vsel %vm56, %v47, 0
    %60 = vmatpush.msra.mxu0 0.0
    %61 = vmatpush.msra.mxu0 0.0
    %62 = vmatpush.msra.mxu0 0.0
    %63 = vmatpush.msra.mxu0 0.0
    %64 = vmatpush.msra.mxu0 0.0
    %65 = vmatpush.msra.mxu0 0.0
    %66 = vmatpush.msra.mxu0 0.0
    %67 = vmatpush.msra.mxu0 0.0
    %68 = vmatpush.msra.mxu0 0.0
    %69 = vmatpush.msra.mxu0 0.0
    %70 = vmatpush.msra.mxu0 0.0
    %71 = vmatpush.msra.mxu0 0.0
    %72 = vmatpush.msra.mxu0 0.0
    %73 = vmatpush.msra.mxu0 0.0
    %74 = vmatpush.msra.mxu0 %v58
    %75 = vmatpush.msra.mxu0 %v46
    %76 = vmatmul.f32.gmra.mxu0 %v54
    %v77 = vpop.f32.mrf.mxu0
    %v78 = vadd.f32 %v50, %v77
    %79 = vdwg.mxu0
    %80 = vst.msk [vmem:[#allocation7] sm:$0xff] %vm52, %v78
    // Predicated region
    $region22: #{tpu_custom_call.1} parent=1 // pred_check
      _
    $region23: #{tpu_custom_call.1} parent=1 // pred_check_branch
      %82 = sbr.rel (0) target = $region25
    $region24: #{tpu_custom_call.1} parent=1 // pred_region
      %84 = vsyncadd [#allocation4], 0
      %s86 = sshll.u32 [#allocation7], 4
      %s87 = int_to_ptr.vmem [resolvable:$true] %s86
      %s88 = sshll.u32 %s3, 4
      %s89 = int_to_ptr.hbm [resolvable:$true] %s88
      %91 = dma.vmem_to_hbm [thread:$0]  %s87, 128, %s89, [#allocation4]
    $region25: #{tpu_custom_call.1} parent=1 // pred_fallthru
      _
    // Predicated region
    $region26: #{tpu_custom_call.1} parent=1 // pred_check
      _
    $region27: #{tpu_custom_call.1} parent=1 // pred_check_branch
      %93 = sbr.rel (0) target = $region29
    $region28: #{tpu_custom_call.1} parent=1 // pred_region
      %95 = dma.done [#allocation4], 128
    $region29: #{tpu_custom_call.1} parent=1 // pred_fallthru
      _
    %96 = vsyncpa [#allocation3], 1
    %97 = vsyncpa [#allocation6], 1
    %98 = vsyncpa [#allocation4], 1

</llo_original>
